<compile_context>
chip_gen: v7x
topology: tpu7x:2x2x1
jax: 0.10.0
libtpu: 0.0.40
codegen_flags: <defaults>
</compile_context>

<pallas_src>
import functools

import jax
import jax.numpy as jnp
from jax.experimental import pallas as pl
from jax.experimental.pallas import tpu as pltpu


def _split_cat_dma_kernel(x_hbm, o_hbm, sem, *, chunk, n_chunks, feat):
    # x_hbm: (n_chunks*chunk, feat) raw HBM ref
    # o_hbm: (chunk, n_chunks*feat) raw HBM ref
    # Three overlapped rectangular HBM->HBM DMAs: input row-chunk k goes to
    # output column-slot k.  Start all, then wait all (overlap the transfers).
    copies = []
    for k in range(n_chunks):
        cp = pltpu.make_async_copy(
            x_hbm.at[pl.ds(k * chunk, chunk), :],
            o_hbm.at[:, pl.ds(k * feat, feat)],
            sem.at[k],
        )
        cp.start()
        copies.append(cp)
    for cp in copies:
        cp.wait()


def split_cat(x, *, chunk=8, n_chunks=3):
    """Equivalent of torch.split(x, (8, 8, 8), dim=0) followed by cat(dim=1)."""
    N, C, H, W = x.shape
    assert N == chunk * n_chunks, f"dim 0 must be {chunk * n_chunks}, got {N}"

    feat = C * H * W  # flattened feature dim (contiguous reshape is free)
    x2 = x.reshape(N, feat)

    kernel = functools.partial(
        _split_cat_dma_kernel, chunk=chunk, n_chunks=n_chunks, feat=feat)

    out2 = pl.pallas_call(
        kernel,
        out_shape=jax.ShapeDtypeStruct((chunk, n_chunks * feat), x.dtype),
        # Raw HBM refs: no VMEM staging, the kernel drives DMA directly.
        in_specs=[pl.BlockSpec(memory_space=pl.ANY)],
        out_specs=pl.BlockSpec(memory_space=pl.ANY),
        scratch_shapes=[pltpu.SemaphoreType.DMA((n_chunks,))],
        cost_estimate=pl.CostEstimate(
            flops=0,
            transcendentals=0,
            bytes_accessed=2 * x.size * x.dtype.itemsize,
        ),
    )(x2)

    return out2.reshape(chunk, n_chunks * C, H, W)


if __name__ == "__main__":
    key = jax.random.PRNGKey(0)
    # Small shape consistent with the module: dim 0 = 8 + 8 + 8 = 24.
    N, C, H, W = 24, 4, 8, 8
    x = jax.random.normal(key, (N, C, H, W), dtype=jnp.float32)

    out = split_cat(x)
    out = jax.block_until_ready(out)

    # Reference semantics (plain JAX): split dim 0 into chunks of 8, cat on dim 1.
    ref = jnp.concatenate([x[0:8], x[8:16], x[16:24]], axis=1)

    assert out.shape == (8, 3 * C, H, W), out.shape
    assert jnp.array_equal(out, ref), "mismatch vs reference"

    print("KERNEL_OK")
</pallas_src>

<mosaic_0001>
module attributes {stable_mosaic.version = 11 : i64} {
  func.func @_split_cat_dma_kernel(%arg0: memref<24x256xf32, #tpu.memory_space<any>>, %arg1: memref<8x768xf32, #tpu.memory_space<any>>, %arg2: memref<3x!tpu.dma_semaphore, #tpu.memory_space<semaphore_mem>>) attributes {dimension_semantics = [], scalar_prefetch = 0 : i64, scratch_operands = 1 : i64, tpu.core_type = #tpu.core_type<tc>} {
    %c0_i32 = arith.constant 0 : i32
    %c0_i32_0 = arith.constant 0 : i32
    %c0_i32_1 = arith.constant 0 : i32
    %0 = tpu.memref_slice %arg0[%c0_i32_0, %c0_i32_1] : memref<24x256xf32, #tpu.memory_space<any>> -> memref<8x256xf32, #tpu.memory_space<any>>
    %c0_i32_2 = arith.constant 0 : i32
    %c0_i32_3 = arith.constant 0 : i32
    %1 = tpu.memref_slice %arg1[%c0_i32_2, %c0_i32_3] : memref<8x768xf32, #tpu.memory_space<any>> -> memref<8x256xf32, #tpu.memory_space<any>>
    %2 = tpu.memref_slice %arg2[%c0_i32] : memref<3x!tpu.dma_semaphore, #tpu.memory_space<semaphore_mem>> -> memref<1x!tpu.dma_semaphore, #tpu.memory_space<semaphore_mem>>
    %3 = tpu.memref_squeeze %2 : memref<1x!tpu.dma_semaphore, #tpu.memory_space<semaphore_mem>> -> memref<!tpu.dma_semaphore, #tpu.memory_space<semaphore_mem>>
    tpu.enqueue_dma source(%0 : memref<8x256xf32, #tpu.memory_space<any>>) target(%1 : memref<8x256xf32, #tpu.memory_space<any>>) target_semaphore(%3 : memref<!tpu.dma_semaphore, #tpu.memory_space<semaphore_mem>>)
    %c1_i32 = arith.constant 1 : i32
    %c8_i32 = arith.constant 8 : i32
    %c0_i32_4 = arith.constant 0 : i32
    %4 = tpu.memref_slice %arg0[%c8_i32, %c0_i32_4] : memref<24x256xf32, #tpu.memory_space<any>> -> memref<8x256xf32, #tpu.memory_space<any>>
    %c0_i32_5 = arith.constant 0 : i32
    %c256_i32 = arith.constant 256 : i32
    %5 = tpu.memref_slice %arg1[%c0_i32_5, %c256_i32] : memref<8x768xf32, #tpu.memory_space<any>> -> memref<8x256xf32, #tpu.memory_space<any>>
    %6 = tpu.memref_slice %arg2[%c1_i32] : memref<3x!tpu.dma_semaphore, #tpu.memory_space<semaphore_mem>> -> memref<1x!tpu.dma_semaphore, #tpu.memory_space<semaphore_mem>>
    %7 = tpu.memref_squeeze %6 : memref<1x!tpu.dma_semaphore, #tpu.memory_space<semaphore_mem>> -> memref<!tpu.dma_semaphore, #tpu.memory_space<semaphore_mem>>
    tpu.enqueue_dma source(%4 : memref<8x256xf32, #tpu.memory_space<any>>) target(%5 : memref<8x256xf32, #tpu.memory_space<any>>) target_semaphore(%7 : memref<!tpu.dma_semaphore, #tpu.memory_space<semaphore_mem>>)
    %c2_i32 = arith.constant 2 : i32
    %c16_i32 = arith.constant 16 : i32
    %c0_i32_6 = arith.constant 0 : i32
    %8 = tpu.memref_slice %arg0[%c16_i32, %c0_i32_6] : memref<24x256xf32, #tpu.memory_space<any>> -> memref<8x256xf32, #tpu.memory_space<any>>
    %c0_i32_7 = arith.constant 0 : i32
    %c512_i32 = arith.constant 512 : i32
    %9 = tpu.memref_slice %arg1[%c0_i32_7, %c512_i32] : memref<8x768xf32, #tpu.memory_space<any>> -> memref<8x256xf32, #tpu.memory_space<any>>
    %10 = tpu.memref_slice %arg2[%c2_i32] : memref<3x!tpu.dma_semaphore, #tpu.memory_space<semaphore_mem>> -> memref<1x!tpu.dma_semaphore, #tpu.memory_space<semaphore_mem>>
    %11 = tpu.memref_squeeze %10 : memref<1x!tpu.dma_semaphore, #tpu.memory_space<semaphore_mem>> -> memref<!tpu.dma_semaphore, #tpu.memory_space<semaphore_mem>>
    tpu.enqueue_dma source(%8 : memref<8x256xf32, #tpu.memory_space<any>>) target(%9 : memref<8x256xf32, #tpu.memory_space<any>>) target_semaphore(%11 : memref<!tpu.dma_semaphore, #tpu.memory_space<semaphore_mem>>)
    %c0_i32_8 = arith.constant 0 : i32
    %c0_i32_9 = arith.constant 0 : i32
    %c0_i32_10 = arith.constant 0 : i32
    %12 = tpu.memref_slice %arg0[%c0_i32_9, %c0_i32_10] : memref<24x256xf32, #tpu.memory_space<any>> -> memref<8x256xf32, #tpu.memory_space<any>>
    %c0_i32_11 = arith.constant 0 : i32
    %c0_i32_12 = arith.constant 0 : i32
    %13 = tpu.memref_slice %arg1[%c0_i32_11, %c0_i32_12] : memref<8x768xf32, #tpu.memory_space<any>> -> memref<8x256xf32, #tpu.memory_space<any>>
    %14 = tpu.memref_slice %arg2[%c0_i32_8] : memref<3x!tpu.dma_semaphore, #tpu.memory_space<semaphore_mem>> -> memref<1x!tpu.dma_semaphore, #tpu.memory_space<semaphore_mem>>
    %15 = tpu.memref_squeeze %14 : memref<1x!tpu.dma_semaphore, #tpu.memory_space<semaphore_mem>> -> memref<!tpu.dma_semaphore, #tpu.memory_space<semaphore_mem>>
    tpu.wait_dma2 semaphore(%15 : memref<!tpu.dma_semaphore, #tpu.memory_space<semaphore_mem>>) src(%12 : memref<8x256xf32, #tpu.memory_space<any>>) dst(%13 : memref<8x256xf32, #tpu.memory_space<any>>)
    %c1_i32_13 = arith.constant 1 : i32
    %c8_i32_14 = arith.constant 8 : i32
    %c0_i32_15 = arith.constant 0 : i32
    %16 = tpu.memref_slice %arg0[%c8_i32_14, %c0_i32_15] : memref<24x256xf32, #tpu.memory_space<any>> -> memref<8x256xf32, #tpu.memory_space<any>>
    %c0_i32_16 = arith.constant 0 : i32
    %c256_i32_17 = arith.constant 256 : i32
    %17 = tpu.memref_slice %arg1[%c0_i32_16, %c256_i32_17] : memref<8x768xf32, #tpu.memory_space<any>> -> memref<8x256xf32, #tpu.memory_space<any>>
    %18 = tpu.memref_slice %arg2[%c1_i32_13] : memref<3x!tpu.dma_semaphore, #tpu.memory_space<semaphore_mem>> -> memref<1x!tpu.dma_semaphore, #tpu.memory_space<semaphore_mem>>
    %19 = tpu.memref_squeeze %18 : memref<1x!tpu.dma_semaphore, #tpu.memory_space<semaphore_mem>> -> memref<!tpu.dma_semaphore, #tpu.memory_space<semaphore_mem>>
    tpu.wait_dma2 semaphore(%19 : memref<!tpu.dma_semaphore, #tpu.memory_space<semaphore_mem>>) src(%16 : memref<8x256xf32, #tpu.memory_space<any>>) dst(%17 : memref<8x256xf32, #tpu.memory_space<any>>)
    %c2_i32_18 = arith.constant 2 : i32
    %c16_i32_19 = arith.constant 16 : i32
    %c0_i32_20 = arith.constant 0 : i32
    %20 = tpu.memref_slice %arg0[%c16_i32_19, %c0_i32_20] : memref<24x256xf32, #tpu.memory_space<any>> -> memref<8x256xf32, #tpu.memory_space<any>>
    %c0_i32_21 = arith.constant 0 : i32
    %c512_i32_22 = arith.constant 512 : i32
    %21 = tpu.memref_slice %arg1[%c0_i32_21, %c512_i32_22] : memref<8x768xf32, #tpu.memory_space<any>> -> memref<8x256xf32, #tpu.memory_space<any>>
    %22 = tpu.memref_slice %arg2[%c2_i32_18] : memref<3x!tpu.dma_semaphore, #tpu.memory_space<semaphore_mem>> -> memref<1x!tpu.dma_semaphore, #tpu.memory_space<semaphore_mem>>
    %23 = tpu.memref_squeeze %22 : memref<1x!tpu.dma_semaphore, #tpu.memory_space<semaphore_mem>> -> memref<!tpu.dma_semaphore, #tpu.memory_space<semaphore_mem>>
    tpu.wait_dma2 semaphore(%23 : memref<!tpu.dma_semaphore, #tpu.memory_space<semaphore_mem>>) src(%20 : memref<8x256xf32, #tpu.memory_space<any>>) dst(%21 : memref<8x256xf32, #tpu.memory_space<any>>)
    return
  }
}

</mosaic_0001>

<llo_original>
// kernel: tpu_custom_call.1
$region0: #{tpu_custom_call.1}
  #allocation0 [shape = 'u32[]', space=smem, size = 0x4, offset = 0x4, fixed_abs, tag = 'smem constant byte address 0x4 - core index']
  #allocation1 [shape = 'u32[144,128]{1,0:T(1,128)}', space=vmem, size = 0x12000, scoped, tag = 'internal scratch']
  #allocation2 [shape = 's32[3]{0}', space=sflag, size = 0xc, scoped, tag = 'scratch operand']
  #allocation3 [shape = 's32[]', space=sflag, size = 0x4, offset = 0, fixed_abs, tag = 'sflag constant byte address 0x0 - dummy sync flag']
  #allocation4 [shape = 'u32[0]{0}', space=smem, size = 0, offset = 0, fixed_abs, tag = 'smem constant byte address 0x0 - null']
  #allocation5 [shape = 's32[]', space=sflag, size = 0x4, offset = 0, fixed_abs, tag = 'sflag constant byte address 0x0 - dummy sync flag']
  #allocation6 [shape = 'u32[0]{0}', space=smem, size = 0, offset = 0, fixed_abs, tag = 'smem constant byte address 0x0 - null']
  #allocation7 [shape = 's32[]', space=sflag, size = 0x4, offset = 0, fixed_abs, tag = 'sflag constant byte address 0x0 - dummy sync flag']
  #allocation8 [shape = 'u32[0]{0}', space=smem, size = 0, offset = 0, fixed_abs, tag = 'smem constant byte address 0x0 - null']
  %s0 = inlined_call_operand.hbm [shape: f32[24,256], index: 0, kind: input, shape index: {}]
  %s1 = inlined_call_operand.hbm [shape: f32[8,768], index: 1, kind: output, shape index: {}]
  %s2 = sld [smem:[#allocation0]]
  $region2: #{tpu_custom_call.1} parent=0
    _
  %s4 = ssub.s32 1, %s2
  %s5 = scalar_select 0, %s4, %s2
  %s7 = sshll.u32 1, 14
  %s8 = sxor.u32 4294967295, %s7
  %s11 = sshll.u32 3, 24
  %s12 = sxor.u32 4294967295, %s11
  %s13 = sand.u32 0, %s12
  %s15 = sor.u32 %s13, 0
  %18 = dma.general %s0, 256, %s1, [#allocation2], [#allocation3], [#allocation4], %s15, 0
  %s19 = scalar_lea.hbm %s0, 256
  %s20 = scalar_lea.hbm %s1, 256
  %s21 = scalar_lea.sflag [#allocation2], 1
  %s23 = sshll.u32 1, 14
  %s24 = sxor.u32 4294967295, %s23
  %s27 = sshll.u32 3, 24
  %s28 = sxor.u32 4294967295, %s27
  %s29 = sand.u32 0, %s28
  %s31 = sor.u32 %s29, 0
  %34 = dma.general %s19, 256, %s20, %s21, [#allocation5], [#allocation6], %s31, 0
  %s35 = scalar_lea.hbm %s0, 512
  %s36 = scalar_lea.hbm %s1, 512
  %s37 = scalar_lea.sflag [#allocation2], 2
  %s39 = sshll.u32 1, 14
  %s40 = sxor.u32 4294967295, %s39
  %s43 = sshll.u32 3, 24
  %s44 = sxor.u32 4294967295, %s43
  %s45 = sand.u32 0, %s44
  %s47 = sor.u32 %s45, 0
  %50 = dma.general %s35, 256, %s36, %s37, [#allocation7], [#allocation8], %s47, 0
  %s51 = smul.u32 8, 1
  %s52 = smul.u32 %s51, 2
  %s53 = sshll.u32 %s52, 4
  %54 = dma.done [#allocation2], %s53
  %s55 = sshll.u32 %s52, 4
  %56 = dma.done %s21, %s55
  %s57 = sshll.u32 %s52, 4
  %58 = dma.done %s37, %s57
  %59 = vsyncmov [#allocation2]
  %s60 = vpop.sfrf %59
  %p61 = scmp.eq.s32.totalorder %s60, 0
  %p62 = pneg %p61
  %64 = shalt.err (%p62)
  %s65 = scalar_lea.sflag [#allocation2], 1
  %66 = vsyncmov %s65
  %s67 = vpop.sfrf %66
  %p68 = scmp.eq.s32.totalorder %s67, 0
  %p69 = pneg %p68
  %71 = shalt.err (%p69)
  %s72 = scalar_lea.sflag [#allocation2], 2
  %73 = vsyncmov %s72
  %s74 = vpop.sfrf %73
  %p75 = scmp.eq.s32.totalorder %s74, 0
  %p76 = pneg %p75
  %78 = shalt.err (%p76)

</llo_original>
